<compile_context>
chip_gen: v6e
topology: v6e:2x2x1
jax: 0.10.0
libtpu: 0.0.40
codegen_flags: <defaults>
</compile_context>

<pallas_src>
import math
from functools import partial

import jax
import jax.numpy as jnp
from jax.experimental import pallas as pl
from jax.experimental.pallas import tpu as pltpu


def _round_up(x, m):
    return (x + m - 1) // m * m


def _vmem_capacity_bytes():
    """Per-core VMEM capacity; conservative fallback if the query fails."""
    try:
        cap = getattr(pltpu.get_tpu_info(), "vmem_capacity_bytes", None)
        if cap:
            return int(cap)
    except Exception:
        pass
    return 64 * 1024 * 1024  # v7x-sized fallback (safe on v5e/v6e too)


# ---------------------------------------------------------------------------
# Fast path: VMEM-resident table + one-hot MXU gather (no per-token DMAs).
# ---------------------------------------------------------------------------
def _resident_onehot_kernel(tok_ref, tbl_ref, out_ref, *, group, d_half,
                            scale, v_chunk):
    """tok_ref: VMEM int32 [rows_out, group]   (ids for this row tile)
    tbl_ref: VMEM float  [V, d_half]           (resident: constant index_map)
    out_ref: VMEM float  [rows_out, group*d_half] (lane-packed output tile)
    """
    V = tbl_ref.shape[0]
    rows_out = out_ref.shape[0]
    n_full = V // v_chunk
    rem = V - n_full * v_chunk

    for j in range(group):                       # static lane stripe
        tok_j = tok_ref[:, j:j + 1]              # [rows_out, 1] int32

        acc = jnp.zeros((rows_out, d_half), jnp.float32)

        if n_full > 0:                           # full-size vocab chunks
            def chunk_body(c, acc):
                k0 = pl.multiple_of(c * v_chunk, v_chunk)
                ids = (jax.lax.broadcasted_iota(
                    jnp.int32, (rows_out, v_chunk), 1) + c * v_chunk)
                onehot = (tok_j == ids).astype(jnp.float32)
                tile = tbl_ref[pl.ds(k0, v_chunk), :].astype(jnp.float32)
                return acc + jnp.dot(onehot, tile,
                                     preferred_element_type=jnp.float32)
            acc = jax.lax.fori_loop(0, n_full, chunk_body, acc)

        if rem:                                  # static ragged tail chunk
            k0 = n_full * v_chunk
            ids = jax.lax.broadcasted_iota(jnp.int32, (rows_out, rem), 1) + k0
            onehot = (tok_j == ids).astype(jnp.float32)
            tile = tbl_ref[k0:V, :].astype(jnp.float32)
            acc = acc + jnp.dot(onehot, tile,
                                preferred_element_type=jnp.float32)

        # Fused sqrt(d_model) scale on the store (out-of-range ids -> zeros).
        out_ref[:, j * d_half:(j + 1) * d_half] = (
            acc * scale).astype(out_ref.dtype)


# ---------------------------------------------------------------------------
# Fallback: table too large for VMEM -> per-row HBM DMA gather,
# double-buffered across grid steps with one aggregate wait per tile.
# ---------------------------------------------------------------------------
def _hbm_gather_kernel(tok_ref, emb_hbm, out_ref, gbuf, sem, *,
                       rows_per_tile, d_half, group, scale):
    """tok_ref: SMEM int32 [n_pad]   (scalar prefetch: whole id vector, needed
                                      for next-tile lookahead)
    emb_hbm: HBM  float [V, d_half]  (memory_space=pl.ANY, manual DMA)
    out_ref: VMEM float [rows_out, group*d_half]
    gbuf   : VMEM float [2, group, rows_out, d_half]   (double buffer)
    sem    : DMA semaphores [2]
    """
    i = pl.program_id(0)
    ngrid = pl.num_programs(0)
    rows_out = rows_per_tile // group
    V = emb_hbm.shape[0]

    def issue_tile(t, slot):
        base = t * rows_per_tile
        for j in range(group):                   # static lane stripe
            def issue(k, carry):
                tok = tok_ref[base + k * group + j]
                tok = jnp.minimum(jnp.maximum(tok, 0), V - 1)  # never DMA OOB
                pltpu.make_async_copy(
                    emb_hbm.at[pl.ds(tok, 1), :],
                    gbuf.at[slot, j, pl.ds(k, 1), :],
                    sem.at[slot],
                ).start()
                return carry
            jax.lax.fori_loop(0, rows_out, issue, 0,
                              unroll=min(8, rows_out))

    # Prime the pipeline with tile 0 on the first grid step.
    @pl.when(i == 0)
    def _():
        issue_tile(0, 0)

    slot = i % 2

    # Lookahead: issue tile i+1's row gathers before waiting on tile i so DMA
    # flight overlaps this tile's finalize + output writeback.  Cross-step
    # dependency => grid axis is marked "arbitrary" (stays on one core).
    @pl.when(i + 1 < ngrid)
    def _():
        issue_tile(i + 1, 1 - slot)

    # One aggregate wait per tile: DMA semaphores count bytes, so a single
    # wait sized to the whole slot covers all `rows_per_tile` row copies.
    pltpu.make_async_copy(gbuf.at[slot], gbuf.at[slot], sem.at[slot]).wait()

    # Finalize: fused sqrt(d_model) scale, one store per lane stripe into the
    # lane-packed output block (HBM writeback is full-lane).
    for j in range(group):
        out_ref[:, j * d_half:(j + 1) * d_half] = (
            gbuf[slot, j] * scale).astype(out_ref.dtype)


# ---------------------------------------------------------------------------
# Wrapper
# ---------------------------------------------------------------------------
def sin_cos_concat_text_encoder(src, emb_table, d_model, *,
                                rows_per_tile=None, v_chunk=512,
                                force_hbm_gather=False):
    """src: int [seq_len, batch]; emb_table: float [n_tokens, d_model // 2].

    Returns emb_table[src] * sqrt(d_model), shape [seq_len, batch, d_model//2].
    """
    seq_len, batch = src.shape
    V, d_half = emb_table.shape
    assert d_half == d_model // 2, "embedding width must be d_model // 2"
    n = seq_len * batch
    scale = math.sqrt(d_model)
    itemsize = jnp.dtype(emb_table.dtype).itemsize

    # --- chip-dependent dispatch: resident table vs HBM row gather ---------
    cap = _vmem_capacity_bytes()
    table_bytes = V * d_half * itemsize
    # ~0.35 * VMEM leaves room for the (double-buffered) table + id/output
    # blocks + one-hot temporaries: ~22 MiB on v7x, ~45 MiB on v5e/v6e.
    resident = (not force_hbm_gather) and (table_bytes <= int(0.35 * cap))

    # --- lane-dense packing: `group` tokens per 128-lane output row --------
    group = 1
    if d_half < 128 and 128 % d_half == 0:
        group = 128 // d_half
    unit = 8 * group                 # row tile must be a multiple of this
    out_cols = group * d_half

    # --- row tiling over the flattened seq*batch token axis ----------------
    tr_target = rows_per_tile if rows_per_tile is not None else (
        1024 if resident else 256)
    # Shrink the tile for small problems so grid >= 2 whenever there are two
    # tiles of real work (keeps both v7x TensorCores busy on the fast path).
    tr = _round_up(min(_round_up(tr_target, unit), max(n // 2, unit)), unit)
    tr = min(tr, _round_up(n, unit))
    n_pad = _round_up(n, tr)
    grid = n_pad // tr
    rows_out = tr // group
    out_rows_total = n_pad // group

    tok = src.reshape(-1).astype(jnp.int32)
    if n_pad != n:
        tok = jnp.pad(tok, (0, n_pad - n))   # padded rows are sliced off below

    out_shape = jax.ShapeDtypeStruct((out_rows_total, out_cols),
                                     emb_table.dtype)

    if resident:
        kernel = partial(_resident_onehot_kernel, group=group, d_half=d_half,
                         scale=scale, v_chunk=v_chunk)
        vmem_limit = max(
            32 * 1024 * 1024,
            min(int(0.9 * cap), 2 * table_bytes + (64 << 20), 128 << 20))
        out = pl.pallas_call(
            kernel,
            out_shape=out_shape,
            grid_spec=pltpu.PrefetchScalarGridSpec(
                num_scalar_prefetch=0,
                grid=(grid,),
                in_specs=[
                    # per-tile token ids (VMEM, pipelined by the grid)
                    pl.BlockSpec((rows_out, group), lambda i: (i, 0)),
                    # whole table, constant index map -> DMA'd once, resident
                    pl.BlockSpec((V, d_half), lambda i: (0, 0)),
                ],
                out_specs=pl.BlockSpec((rows_out, out_cols),
                                       lambda i: (i, 0)),
            ),
            compiler_params=pltpu.CompilerParams(
                dimension_semantics=("parallel",),   # shard tiles on v7x 2xTC
                vmem_limit_bytes=vmem_limit),
        )(tok.reshape(out_rows_total, group), emb_table)
    else:
        # TODO(synk): a resident-table dynamic-row-load path (exact gather, no
        # one-hot FLOPs) for mid-size vocabs, and chunked id prefetch for
        # >~256K tokens, would further improve this fallback.
        kernel = partial(_hbm_gather_kernel, rows_per_tile=tr, d_half=d_half,
                         group=group, scale=scale)
        out = pl.pallas_call(
            kernel,
            out_shape=out_shape,
            grid_spec=pltpu.PrefetchScalarGridSpec(
                # Whole id vector in SMEM: the double-buffered lookahead needs
                # tile i+1's ids while tile i is still in flight.
                num_scalar_prefetch=1,
                grid=(grid,),
                in_specs=[pl.BlockSpec(memory_space=pl.ANY)],  # table in HBM
                out_specs=pl.BlockSpec((rows_out, out_cols),
                                       lambda i, tok_ref: (i, 0)),
                scratch_shapes=[
                    pltpu.VMEM((2, group, rows_out, d_half), emb_table.dtype),
                    pltpu.SemaphoreType.DMA((2,)),
                ],
            ),
            compiler_params=pltpu.CompilerParams(
                # lookahead = cross-step dependency => keep on one core
                dimension_semantics=("arbitrary",),
                vmem_limit_bytes=32 * 1024 * 1024),
        )(tok, emb_table)

    out = out.reshape(n_pad, d_half)[:n]
    return out.reshape(seq_len, batch, d_half)


if __name__ == "__main__":
    key = jax.random.PRNGKey(0)
    k_emb, k_src1, k_src2, k_emb3, k_src3, k_src4 = jax.random.split(key, 6)

    def ref_fn(tbl, ids, dm):
        return tbl[ids] * math.sqrt(dm)

    # Config consistent with the module: nn.Embedding(32, 16), d_model=32.
    n_tokens, d_model, init_range = 32, 32, 0.1
    d_half = d_model // 2
    emb = jax.random.uniform(k_emb, (n_tokens, d_half), minval=-init_range,
                             maxval=init_range, dtype=jnp.float32)

    # Tolerance note: the resident path gathers via a one-hot MXU matmul; f32
    # MXU passes use a bf16 decomposition, so compare with a small tolerance
    # (a wrong row / missing sqrt(d_model) scale would be off by >> 1e-2).
    TOL = dict(atol=1e-3, rtol=5e-3)

    # 1) Small shape (seq=8, batch=2): resident one-hot path, lane packing.
    src1 = jax.random.randint(k_src1, (8, 2), 0, n_tokens, dtype=jnp.int32)
    out1 = jax.block_until_ready(sin_cos_concat_text_encoder(src1, emb, d_model))
    assert out1.shape == (8, 2, d_half)
    assert jnp.allclose(out1, ref_fn(emb, src1, d_model), **TOL)

    # 2) Multi-tile resident path (grid >= 2, padded tail rows).
    src2 = jax.random.randint(k_src2, (40, 8), 0, n_tokens, dtype=jnp.int32)
    out2 = jax.block_until_ready(sin_cos_concat_text_encoder(src2, emb, d_model))
    assert jnp.allclose(out2, ref_fn(emb, src2, d_model), **TOL)

    # 3) Resident path with d_half >= 128 (no packing) and vocab chunking.
    n_tokens3, d_model3 = 1000, 256
    emb3 = jax.random.uniform(k_emb3, (n_tokens3, d_model3 // 2), minval=-0.1,
                              maxval=0.1, dtype=jnp.float32)
    src3 = jax.random.randint(k_src3, (16, 4), 0, n_tokens3, dtype=jnp.int32)
    out3 = jax.block_until_ready(
        sin_cos_concat_text_encoder(src3, emb3, d_model3))
    assert out3.shape == (16, 4, d_model3 // 2)
    assert jnp.allclose(out3, ref_fn(emb3, src3, d_model3), **TOL)

    # 4) Forced huge-vocab fallback: double-buffered HBM row gather (grid=3),
    #    bit-exact vs the reference (pure copies + one f32 multiply).
    src4 = jax.random.randint(k_src4, (20, 8), 0, n_tokens, dtype=jnp.int32)
    out4 = jax.block_until_ready(
        sin_cos_concat_text_encoder(src4, emb, d_model,
                                    rows_per_tile=64, force_hbm_gather=True))
    assert jnp.allclose(out4, ref_fn(emb, src4, d_model), atol=1e-6, rtol=1e-6)

    print("KERNEL_OK")
</pallas_src>

<mosaic_0001>
module attributes {stable_mosaic.version = 11 : i64} {
  func.func @_resident_onehot_kernel(%arg0: i32, %arg1: memref<8x8xi32, #tpu.memory_space<vmem>>, %arg2: memref<32x16xf32, #tpu.memory_space<vmem>>, %arg3: memref<8x128xf32, #tpu.memory_space<vmem>>) attributes {dimension_semantics = [#tpu.dimension_semantics<parallel>], iteration_bounds = array<i64: 1>, scalar_prefetch = 0 : i64, scratch_operands = 0 : i64, tpu.core_type = #tpu.core_type<tc>, window_params = [{transform_indices = @transform_0, window_bounds = array<i64: 8, 8>}, {pipeline_mode = #tpu.pipeline_mode<synchronous>, transform_indices = @transform_1, window_bounds = array<i64: 32, 16>}, {transform_indices = @transform_2, window_bounds = array<i64: 8, 128>}]} {
    %c0 = arith.constant 0 : index
    %c0_0 = arith.constant 0 : index
    %0 = vector.load %arg1[%c0, %c0_0] : memref<8x8xi32, #tpu.memory_space<vmem>>, vector<8x1xi32>
    %cst = arith.constant 0.000000e+00 : f32
    %1 = vector.broadcast %cst : f32 to vector<8x16xf32>
    %2 = tpu.iota {dimensions = array<i32: 1>} : vector<8x32xi32>
    %c0_i32 = arith.constant 0 : i32
    %3 = vector.broadcast %c0_i32 : i32 to vector<8x32xi32>
    %4 = arith.addi %2, %3 : vector<8x32xi32>
    %5 = vector.broadcast %0 : vector<8x1xi32> to vector<8x32xi32>
    %6 = arith.cmpi eq, %5, %4 : vector<8x32xi32>
    %7 = arith.extui %6 : vector<8x32xi1> to vector<8x32xi32>
    %8 = arith.sitofp %7 : vector<8x32xi32> to vector<8x32xf32>
    %c0_1 = arith.constant 0 : index
    %c0_2 = arith.constant 0 : index
    %9 = vector.load %arg2[%c0_1, %c0_2] : memref<32x16xf32, #tpu.memory_space<vmem>>, vector<32x16xf32>
    %cst_3 = arith.constant dense<0.000000e+00> : vector<8x16xf32>
    %10 = tpu.matmul %8, %9, %cst_3 {dimension_numbers = #tpu.dot_dimension_numbers<[1], [0], [0], [1], [0, 0, 1, 1], [], []>} : vector<8x32xf32>, vector<32x16xf32>, vector<8x16xf32> -> vector<8x16xf32>
    %11 = arith.addf %1, %10 : vector<8x16xf32>
    %cst_4 = arith.constant 5.65685415 : f32
    %12 = vector.broadcast %cst_4 : f32 to vector<8x16xf32>
    %13 = arith.mulf %11, %12 : vector<8x16xf32>
    %c0_5 = arith.constant 0 : index
    %c0_6 = arith.constant 0 : index
    %14 = vector.load %arg3[%c0_5, %c0_6] : memref<8x128xf32, #tpu.memory_space<vmem>>, vector<8x16xf32>
    tpu.vector_store %arg3[%c0_5, %c0_6], %13 {strides = array<i32>} : memref<8x128xf32, #tpu.memory_space<vmem>>, vector<8x16xf32>,
    %c0_7 = arith.constant 0 : index
    %c1 = arith.constant 1 : index
    %15 = vector.load %arg1[%c0_7, %c1] : memref<8x8xi32, #tpu.memory_space<vmem>>, vector<8x1xi32>
    %cst_8 = arith.constant 0.000000e+00 : f32
    %16 = vector.broadcast %cst_8 : f32 to vector<8x16xf32>
    %17 = tpu.iota {dimensions = array<i32: 1>} : vector<8x32xi32>
    %c0_i32_9 = arith.constant 0 : i32
    %18 = vector.broadcast %c0_i32_9 : i32 to vector<8x32xi32>
    %19 = arith.addi %17, %18 : vector<8x32xi32>
    %20 = vector.broadcast %15 : vector<8x1xi32> to vector<8x32xi32>
    %21 = arith.cmpi eq, %20, %19 : vector<8x32xi32>
    %22 = arith.extui %21 : vector<8x32xi1> to vector<8x32xi32>
    %23 = arith.sitofp %22 : vector<8x32xi32> to vector<8x32xf32>
    %c0_10 = arith.constant 0 : index
    %c0_11 = arith.constant 0 : index
    %24 = vector.load %arg2[%c0_10, %c0_11] : memref<32x16xf32, #tpu.memory_space<vmem>>, vector<32x16xf32>
    %cst_12 = arith.constant dense<0.000000e+00> : vector<8x16xf32>
    %25 = tpu.matmul %23, %24, %cst_12 {dimension_numbers = #tpu.dot_dimension_numbers<[1], [0], [0], [1], [0, 0, 1, 1], [], []>} : vector<8x32xf32>, vector<32x16xf32>, vector<8x16xf32> -> vector<8x16xf32>
    %26 = arith.addf %16, %25 : vector<8x16xf32>
    %cst_13 = arith.constant 5.65685415 : f32
    %27 = vector.broadcast %cst_13 : f32 to vector<8x16xf32>
    %28 = arith.mulf %26, %27 : vector<8x16xf32>
    %c0_14 = arith.constant 0 : index
    %c16 = arith.constant 16 : index
    %29 = vector.load %arg3[%c0_14, %c16] : memref<8x128xf32, #tpu.memory_space<vmem>>, vector<8x16xf32>
    tpu.vector_store %arg3[%c0_14, %c16], %28 {strides = array<i32>} : memref<8x128xf32, #tpu.memory_space<vmem>>, vector<8x16xf32>,
    %c0_15 = arith.constant 0 : index
    %c2 = arith.constant 2 : index
    %30 = vector.load %arg1[%c0_15, %c2] : memref<8x8xi32, #tpu.memory_space<vmem>>, vector<8x1xi32>
    %cst_16 = arith.constant 0.000000e+00 : f32
    %31 = vector.broadcast %cst_16 : f32 to vector<8x16xf32>
    %32 = tpu.iota {dimensions = array<i32: 1>} : vector<8x32xi32>
    %c0_i32_17 = arith.constant 0 : i32
    %33 = vector.broadcast %c0_i32_17 : i32 to vector<8x32xi32>
    %34 = arith.addi %32, %33 : vector<8x32xi32>
    %35 = vector.broadcast %30 : vector<8x1xi32> to vector<8x32xi32>
    %36 = arith.cmpi eq, %35, %34 : vector<8x32xi32>
    %37 = arith.extui %36 : vector<8x32xi1> to vector<8x32xi32>
    %38 = arith.sitofp %37 : vector<8x32xi32> to vector<8x32xf32>
    %c0_18 = arith.constant 0 : index
    %c0_19 = arith.constant 0 : index
    %39 = vector.load %arg2[%c0_18, %c0_19] : memref<32x16xf32, #tpu.memory_space<vmem>>, vector<32x16xf32>
    %cst_20 = arith.constant dense<0.000000e+00> : vector<8x16xf32>
    %40 = tpu.matmul %38, %39, %cst_20 {dimension_numbers = #tpu.dot_dimension_numbers<[1], [0], [0], [1], [0, 0, 1, 1], [], []>} : vector<8x32xf32>, vector<32x16xf32>, vector<8x16xf32> -> vector<8x16xf32>
    %41 = arith.addf %31, %40 : vector<8x16xf32>
    %cst_21 = arith.constant 5.65685415 : f32
    %42 = vector.broadcast %cst_21 : f32 to vector<8x16xf32>
    %43 = arith.mulf %41, %42 : vector<8x16xf32>
    %c0_22 = arith.constant 0 : index
    %c32 = arith.constant 32 : index
    %44 = vector.load %arg3[%c0_22, %c32] : memref<8x128xf32, #tpu.memory_space<vmem>>, vector<8x16xf32>
    tpu.vector_store %arg3[%c0_22, %c32], %43 {strides = array<i32>} : memref<8x128xf32, #tpu.memory_space<vmem>>, vector<8x16xf32>,
    %c0_23 = arith.constant 0 : index
    %c3 = arith.constant 3 : index
    %45 = vector.load %arg1[%c0_23, %c3] : memref<8x8xi32, #tpu.memory_space<vmem>>, vector<8x1xi32>
    %cst_24 = arith.constant 0.000000e+00 : f32
    %46 = vector.broadcast %cst_24 : f32 to vector<8x16xf32>
    %47 = tpu.iota {dimensions = array<i32: 1>} : vector<8x32xi32>
    %c0_i32_25 = arith.constant 0 : i32
    %48 = vector.broadcast %c0_i32_25 : i32 to vector<8x32xi32>
    %49 = arith.addi %47, %48 : vector<8x32xi32>
    %50 = vector.broadcast %45 : vector<8x1xi32> to vector<8x32xi32>
    %51 = arith.cmpi eq, %50, %49 : vector<8x32xi32>
    %52 = arith.extui %51 : vector<8x32xi1> to vector<8x32xi32>
    %53 = arith.sitofp %52 : vector<8x32xi32> to vector<8x32xf32>
    %c0_26 = arith.constant 0 : index
    %c0_27 = arith.constant 0 : index
    %54 = vector.load %arg2[%c0_26, %c0_27] : memref<32x16xf32, #tpu.memory_space<vmem>>, vector<32x16xf32>
    %cst_28 = arith.constant dense<0.000000e+00> : vector<8x16xf32>
    %55 = tpu.matmul %53, %54, %cst_28 {dimension_numbers = #tpu.dot_dimension_numbers<[1], [0], [0], [1], [0, 0, 1, 1], [], []>} : vector<8x32xf32>, vector<32x16xf32>, vector<8x16xf32> -> vector<8x16xf32>
    %56 = arith.addf %46, %55 : vector<8x16xf32>
    %cst_29 = arith.constant 5.65685415 : f32
    %57 = vector.broadcast %cst_29 : f32 to vector<8x16xf32>
    %58 = arith.mulf %56, %57 : vector<8x16xf32>
    %c0_30 = arith.constant 0 : index
    %c48 = arith.constant 48 : index
    %59 = vector.load %arg3[%c0_30, %c48] : memref<8x128xf32, #tpu.memory_space<vmem>>, vector<8x16xf32>
    tpu.vector_store %arg3[%c0_30, %c48], %58 {strides = array<i32>} : memref<8x128xf32, #tpu.memory_space<vmem>>, vector<8x16xf32>,
    %c0_31 = arith.constant 0 : index
    %c4 = arith.constant 4 : index
    %60 = vector.load %arg1[%c0_31, %c4] : memref<8x8xi32, #tpu.memory_space<vmem>>, vector<8x1xi32>
    %cst_32 = arith.constant 0.000000e+00 : f32
    %61 = vector.broadcast %cst_32 : f32 to vector<8x16xf32>
    %62 = tpu.iota {dimensions = array<i32: 1>} : vector<8x32xi32>
    %c0_i32_33 = arith.constant 0 : i32
    %63 = vector.broadcast %c0_i32_33 : i32 to vector<8x32xi32>
    %64 = arith.addi %62, %63 : vector<8x32xi32>
    %65 = vector.broadcast %60 : vector<8x1xi32> to vector<8x32xi32>
    %66 = arith.cmpi eq, %65, %64 : vector<8x32xi32>
    %67 = arith.extui %66 : vector<8x32xi1> to vector<8x32xi32>
    %68 = arith.sitofp %67 : vector<8x32xi32> to vector<8x32xf32>
    %c0_34 = arith.constant 0 : index
    %c0_35 = arith.constant 0 : index
    %69 = vector.load %arg2[%c0_34, %c0_35] : memref<32x16xf32, #tpu.memory_space<vmem>>, vector<32x16xf32>
    %cst_36 = arith.constant dense<0.000000e+00> : vector<8x16xf32>
    %70 = tpu.matmul %68, %69, %cst_36 {dimension_numbers = #tpu.dot_dimension_numbers<[1], [0], [0], [1], [0, 0, 1, 1], [], []>} : vector<8x32xf32>, vector<32x16xf32>, vector<8x16xf32> -> vector<8x16xf32>
    %71 = arith.addf %61, %70 : vector<8x16xf32>
    %cst_37 = arith.constant 5.65685415 : f32
    %72 = vector.broadcast %cst_37 : f32 to vector<8x16xf32>
    %73 = arith.mulf %71, %72 : vector<8x16xf32>
    %c0_38 = arith.constant 0 : index
    %c64 = arith.constant 64 : index
    %74 = vector.load %arg3[%c0_38, %c64] : memref<8x128xf32, #tpu.memory_space<vmem>>, vector<8x16xf32>
    tpu.vector_store %arg3[%c0_38, %c64], %73 {strides = array<i32>} : memref<8x128xf32, #tpu.memory_space<vmem>>, vector<8x16xf32>,
    %c0_39 = arith.constant 0 : index
    %c5 = arith.constant 5 : index
    %75 = vector.load %arg1[%c0_39, %c5] : memref<8x8xi32, #tpu.memory_space<vmem>>, vector<8x1xi32>
    %cst_40 = arith.constant 0.000000e+00 : f32
    %76 = vector.broadcast %cst_40 : f32 to vector<8x16xf32>
    %77 = tpu.iota {dimensions = array<i32: 1>} : vector<8x32xi32>
    %c0_i32_41 = arith.constant 0 : i32
    %78 = vector.broadcast %c0_i32_41 : i32 to vector<8x32xi32>
    %79 = arith.addi %77, %78 : vector<8x32xi32>
    %80 = vector.broadcast %75 : vector<8x1xi32> to vector<8x32xi32>
    %81 = arith.cmpi eq, %80, %79 : vector<8x32xi32>
    %82 = arith.extui %81 : vector<8x32xi1> to vector<8x32xi32>
    %83 = arith.sitofp %82 : vector<8x32xi32> to vector<8x32xf32>
    %c0_42 = arith.constant 0 : index
    %c0_43 = arith.constant 0 : index
    %84 = vector.load %arg2[%c0_42, %c0_43] : memref<32x16xf32, #tpu.memory_space<vmem>>, vector<32x16xf32>
    %cst_44 = arith.constant dense<0.000000e+00> : vector<8x16xf32>
    %85 = tpu.matmul %83, %84, %cst_44 {dimension_numbers = #tpu.dot_dimension_numbers<[1], [0], [0], [1], [0, 0, 1, 1], [], []>} : vector<8x32xf32>, vector<32x16xf32>, vector<8x16xf32> -> vector<8x16xf32>
    %86 = arith.addf %76, %85 : vector<8x16xf32>
    %cst_45 = arith.constant 5.65685415 : f32
    %87 = vector.broadcast %cst_45 : f32 to vector<8x16xf32>
    %88 = arith.mulf %86, %87 : vector<8x16xf32>
    %c0_46 = arith.constant 0 : index
    %c80 = arith.constant 80 : index
    %89 = vector.load %arg3[%c0_46, %c80] : memref<8x128xf32, #tpu.memory_space<vmem>>, vector<8x16xf32>
    tpu.vector_store %arg3[%c0_46, %c80], %88 {strides = array<i32>} : memref<8x128xf32, #tpu.memory_space<vmem>>, vector<8x16xf32>,
    %c0_47 = arith.constant 0 : index
    %c6 = arith.constant 6 : index
    %90 = vector.load %arg1[%c0_47, %c6] : memref<8x8xi32, #tpu.memory_space<vmem>>, vector<8x1xi32>
    %cst_48 = arith.constant 0.000000e+00 : f32
    %91 = vector.broadcast %cst_48 : f32 to vector<8x16xf32>
    %92 = tpu.iota {dimensions = array<i32: 1>} : vector<8x32xi32>
    %c0_i32_49 = arith.constant 0 : i32
    %93 = vector.broadcast %c0_i32_49 : i32 to vector<8x32xi32>
    %94 = arith.addi %92, %93 : vector<8x32xi32>
    %95 = vector.broadcast %90 : vector<8x1xi32> to vector<8x32xi32>
    %96 = arith.cmpi eq, %95, %94 : vector<8x32xi32>
    %97 = arith.extui %96 : vector<8x32xi1> to vector<8x32xi32>
    %98 = arith.sitofp %97 : vector<8x32xi32> to vector<8x32xf32>
    %c0_50 = arith.constant 0 : index
    %c0_51 = arith.constant 0 : index
    %99 = vector.load %arg2[%c0_50, %c0_51] : memref<32x16xf32, #tpu.memory_space<vmem>>, vector<32x16xf32>
    %cst_52 = arith.constant dense<0.000000e+00> : vector<8x16xf32>
    %100 = tpu.matmul %98, %99, %cst_52 {dimension_numbers = #tpu.dot_dimension_numbers<[1], [0], [0], [1], [0, 0, 1, 1], [], []>} : vector<8x32xf32>, vector<32x16xf32>, vector<8x16xf32> -> vector<8x16xf32>
    %101 = arith.addf %91, %100 : vector<8x16xf32>
    %cst_53 = arith.constant 5.65685415 : f32
    %102 = vector.broadcast %cst_53 : f32 to vector<8x16xf32>
    %103 = arith.mulf %101, %102 : vector<8x16xf32>
    %c0_54 = arith.constant 0 : index
    %c96 = arith.constant 96 : index
    %104 = vector.load %arg3[%c0_54, %c96] : memref<8x128xf32, #tpu.memory_space<vmem>>, vector<8x16xf32>
    tpu.vector_store %arg3[%c0_54, %c96], %103 {strides = array<i32>} : memref<8x128xf32, #tpu.memory_space<vmem>>, vector<8x16xf32>,
    %c0_55 = arith.constant 0 : index
    %c7 = arith.constant 7 : index
    %105 = vector.load %arg1[%c0_55, %c7] : memref<8x8xi32, #tpu.memory_space<vmem>>, vector<8x1xi32>
    %cst_56 = arith.constant 0.000000e+00 : f32
    %106 = vector.broadcast %cst_56 : f32 to vector<8x16xf32>
    %107 = tpu.iota {dimensions = array<i32: 1>} : vector<8x32xi32>
    %c0_i32_57 = arith.constant 0 : i32
    %108 = vector.broadcast %c0_i32_57 : i32 to vector<8x32xi32>
    %109 = arith.addi %107, %108 : vector<8x32xi32>
    %110 = vector.broadcast %105 : vector<8x1xi32> to vector<8x32xi32>
    %111 = arith.cmpi eq, %110, %109 : vector<8x32xi32>
    %112 = arith.extui %111 : vector<8x32xi1> to vector<8x32xi32>
    %113 = arith.sitofp %112 : vector<8x32xi32> to vector<8x32xf32>
    %c0_58 = arith.constant 0 : index
    %c0_59 = arith.constant 0 : index
    %114 = vector.load %arg2[%c0_58, %c0_59] : memref<32x16xf32, #tpu.memory_space<vmem>>, vector<32x16xf32>
    %cst_60 = arith.constant dense<0.000000e+00> : vector<8x16xf32>
    %115 = tpu.matmul %113, %114, %cst_60 {dimension_numbers = #tpu.dot_dimension_numbers<[1], [0], [0], [1], [0, 0, 1, 1], [], []>} : vector<8x32xf32>, vector<32x16xf32>, vector<8x16xf32> -> vector<8x16xf32>
    %116 = arith.addf %106, %115 : vector<8x16xf32>
    %cst_61 = arith.constant 5.65685415 : f32
    %117 = vector.broadcast %cst_61 : f32 to vector<8x16xf32>
    %118 = arith.mulf %116, %117 : vector<8x16xf32>
    %c0_62 = arith.constant 0 : index
    %c112 = arith.constant 112 : index
    %119 = vector.load %arg3[%c0_62, %c112] : memref<8x128xf32, #tpu.memory_space<vmem>>, vector<8x16xf32>
    tpu.vector_store %arg3[%c0_62, %c112], %118 {strides = array<i32>} : memref<8x128xf32, #tpu.memory_space<vmem>>, vector<8x16xf32>,
    return
  }
  func.func @transform_0(%arg0: i32) -> (i32, i32) {
    %c0_i32 = arith.constant 0 : i32
    %c0_i32_0 = arith.constant 0 : i32
    return %arg0, %c0_i32 : i32, i32
  }
  func.func @transform_1(%arg0: i32) -> (i32, i32) {
    %c0_i32 = arith.constant 0 : i32
    %c0_i32_0 = arith.constant 0 : i32
    %c0_i32_1 = arith.constant 0 : i32
    return %c0_i32, %c0_i32_0 : i32, i32
  }
  func.func @transform_2(%arg0: i32) -> (i32, i32) {
    %c0_i32 = arith.constant 0 : i32
    %c0_i32_0 = arith.constant 0 : i32
    return %arg0, %c0_i32 : i32, i32
  }
}

</mosaic_0001>

<llo_original>
// kernel: tpu_custom_call.1
$region0: #{tpu_custom_call.1}
  #allocation0 [shape = 'u32[]', space=smem, size = 0x4, offset = 0x4, fixed_abs, tag = 'smem constant byte address 0x4 - core index']
  #allocation1 [shape = 'u32[144,128]{1,0:T(1,128)}', space=vmem, size = 0x12000, scoped, tag = 'internal scratch']
  %s0 = inlined_call_operand.vmem [shape: s32[8,8], index: 0, kind: input, shape index: {}]
  %s1 = inlined_call_operand.vmem [shape: f32[32,16], index: 1, kind: input, shape index: {}]
  %s2 = inlined_call_operand.hbm [shape: f32[8,128], index: 2, kind: output, shape index: {}]
  %s3 = sld [smem:[#allocation0]]
  $region18: #{tpu_custom_call.1} parent=0
    _
  %s5 = ssub.s32 1, %s3
  %s6 = scalar_select 0, %s5, %s3
  $region1: #{tpu_custom_call.1} parent=0
    #allocation2 [shape = 'u8[4096]{0}', space=vmem, size = 0x1000, scoped, tag = 'output window, operand 0, single buffered']
    #allocation3 [shape = 's32[1]{0}', space=sflag, size = 0x4, scoped, tag = 'scoped memory for tpu_custom_call.1']
    %7 = vsyncpa [#allocation3], 0
    // Predicated region
    $region2: #{tpu_custom_call.1} parent=1 // pred_check
      _
    $region3: #{tpu_custom_call.1} parent=1 // pred_check_branch
      %9 = sbr.rel (0) target = $region5
    $region4: #{tpu_custom_call.1} parent=1 // pred_region
      _
    $region5: #{tpu_custom_call.1} parent=1 // pred_fallthru
      _
    // Predicated region
    $region6: #{tpu_custom_call.1} parent=1 // pred_check
      _
    $region7: #{tpu_custom_call.1} parent=1 // pred_check_branch
      %11 = sbr.rel (0) target = $region9
    $region8: #{tpu_custom_call.1} parent=1 // pred_region
      _
    $region9: #{tpu_custom_call.1} parent=1 // pred_fallthru
      _
    %v12 = vld [vmem:[%s0] sm:$0xff]
    %v13 = vlaneseq
    %v14 = vand.u32 %v13, 127
    %15 = vset.pattern.permute.xlu0 0
    %16 = vperm.xlu0 %15, %v12
    %v17 = vpop.permute.xlu0 %16
    %vm18 = vcmp.eq.s32.totalorder %v17, %v14
    %v19 = vsel %vm18, 1, 0
    %v20 = vcvt.s32.f32 %v19
    %v21 = vld [vmem:[%s1] sm:$0xff]
    %v22 = vld [vmem:[%s1 + $0x8] sm:$0xff]
    %v23 = vld [vmem:[%s1 + $0x10] sm:$0xff]
    %v24 = vld [vmem:[%s1 + $0x18] sm:$0xff]
    %vm25 = vcmask 261120
    %v27 = vsel %vm25, %v20, 0
    %29 = vmatprep.subr.mxu0 0.0
    %30 = vmatpush1.msra.mxu0 0.0
    %31 = vmatprep.subr.mxu0 0.0
    %32 = vmatpush1.msra.mxu0 0.0
    %33 = vmatprep.subr.mxu0 0.0
    %34 = vmatpush1.msra.mxu0 0.0
    %35 = vmatprep.subr.mxu0 0.0
    %36 = vmatpush1.msra.mxu0 0.0
    %37 = vmatprep.subr.mxu0 0.0
    %38 = vmatpush1.msra.mxu0 0.0
    %39 = vmatprep.subr.mxu0 0.0
    %40 = vmatpush1.msra.mxu0 0.0
    %41 = vmatprep.subr.mxu0 0.0
    %42 = vmatpush1.msra.mxu0 0.0
    %43 = vmatprep.subr.mxu0 0.0
    %44 = vmatpush1.msra.mxu0 0.0
    %45 = vmatprep.subr.mxu0 0.0
    %46 = vmatpush1.msra.mxu0 0.0
    %47 = vmatprep.subr.mxu0 0.0
    %48 = vmatpush1.msra.mxu0 0.0
    %49 = vmatprep.subr.mxu0 0.0
    %50 = vmatpush1.msra.mxu0 0.0
    %51 = vmatprep.subr.mxu0 0.0
    %52 = vmatpush1.msra.mxu0 0.0
    %53 = vmatprep.subr.mxu0 0.0
    %54 = vmatpush1.msra.mxu0 %v24
    %55 = vmatprep.subr.mxu0 0.0
    %56 = vmatpush1.msra.mxu0 %v23
    %57 = vmatprep.subr.mxu0 0.0
    %58 = vmatpush1.msra.mxu0 %v22
    %59 = vmatprep.subr.mxu0 0.0
    %60 = vmatpush1.msra.mxu0 %v21
    %61 = vmatprep.subr.mxu0 0.0
    %62 = vmatpush2.msra.mxu0 0.0
    %63 = vmatprep.subr.mxu0 0.0
    %64 = vmatpush2.msra.mxu0 0.0
    %65 = vmatprep.subr.mxu0 0.0
    %66 = vmatpush2.msra.mxu0 0.0
    %67 = vmatprep.subr.mxu0 0.0
    %68 = vmatpush2.msra.mxu0 0.0
    %69 = vmatprep.subr.mxu0 0.0
    %70 = vmatpush2.msra.mxu0 0.0
    %71 = vmatprep.subr.mxu0 0.0
    %72 = vmatpush2.msra.mxu0 0.0
    %73 = vmatprep.subr.mxu0 0.0
    %74 = vmatpush2.msra.mxu0 0.0
    %75 = vmatprep.subr.mxu0 0.0
    %76 = vmatpush2.msra.mxu0 0.0
    %77 = vmatprep.subr.mxu0 0.0
    %78 = vmatpush2.msra.mxu0 0.0
    %79 = vmatprep.subr.mxu0 0.0
    %80 = vmatpush2.msra.mxu0 0.0
    %81 = vmatprep.subr.mxu0 0.0
    %82 = vmatpush2.msra.mxu0 0.0
    %83 = vmatprep.subr.mxu0 0.0
    %84 = vmatpush2.msra.mxu0 0.0
    %85 = vmatprep.subr.mxu0 0.0
    %86 = vmatpush2.msra.mxu0 0.0
    %87 = vmatprep.subr.mxu0 0.0
    %88 = vmatpush2.msra.mxu0 0.0
    %89 = vmatprep.subr.mxu0 0.0
    %90 = vmatpush2.msra.mxu0 0.0
    %91 = vmatprep.subr.mxu0 0.0
    %92 = vmatpush2.msra.mxu0 0.0
    %93 = vmatprep.mubr.f32.mxu0 0.0
    %94 = vmatmul.mubr.f32.gmra.mxu0 %v27
    %v95 = vpop.f32.mrf.mxu0
    %v96 = vadd.f32 0.0, %v95
    %v97 = vpop.f32.mrf.mxu0
    %98 = vdwg.mxu0
    %v99 = vmul.f32 %v96, 5.656854
    %vm100 = vcmask 130048
    %101 = vst.msk [vmem:[#allocation2] sm:$0xff] %vm100, %v99
    %v102 = vld [vmem:[%s0] sm:$0xff]
    %103 = vset.pattern.permute.xlu0 1
    %104 = vperm.xlu0 %103, %v102
    %v105 = vpop.permute.xlu0 %104
    %vm106 = vcmp.eq.s32.totalorder %v105, %v14
    %v107 = vsel %vm106, 1, 0
    %v108 = vcvt.s32.f32 %v107
    %v109 = vld [vmem:[%s1] sm:$0xff]
    %v110 = vld [vmem:[%s1 + $0x8] sm:$0xff]
    %v111 = vld [vmem:[%s1 + $0x10] sm:$0xff]
    %v112 = vld [vmem:[%s1 + $0x18] sm:$0xff]
    %v114 = vsel %vm25, %v108, 0
    %116 = vmatprep.subr.mxu0 0.0
    %117 = vmatpush1.msra.mxu0 0.0
    %118 = vmatprep.subr.mxu0 0.0
    %119 = vmatpush1.msra.mxu0 0.0
    %120 = vmatprep.subr.mxu0 0.0
    %121 = vmatpush1.msra.mxu0 0.0
    %122 = vmatprep.subr.mxu0 0.0
    %123 = vmatpush1.msra.mxu0 0.0
    %124 = vmatprep.subr.mxu0 0.0
    %125 = vmatpush1.msra.mxu0 0.0
    %126 = vmatprep.subr.mxu0 0.0
    %127 = vmatpush1.msra.mxu0 0.0
    %128 = vmatprep.subr.mxu0 0.0
    %129 = vmatpush1.msra.mxu0 0.0
    %130 = vmatprep.subr.mxu0 0.0
    %131 = vmatpush1.msra.mxu0 0.0
    %132 = vmatprep.subr.mxu0 0.0
    %133 = vmatpush1.msra.mxu0 0.0
    %134 = vmatprep.subr.mxu0 0.0
    %135 = vmatpush1.msra.mxu0 0.0
    %136 = vmatprep.subr.mxu0 0.0
    %137 = vmatpush1.msra.mxu0 0.0
    %138 = vmatprep.subr.mxu0 0.0
    %139 = vmatpush1.msra.mxu0 0.0
    %140 = vmatprep.subr.mxu0 0.0
    %141 = vmatpush1.msra.mxu0 %v112
    %142 = vmatprep.subr.mxu0 0.0
    %143 = vmatpush1.msra.mxu0 %v111
    %144 = vmatprep.subr.mxu0 0.0
    %145 = vmatpush1.msra.mxu0 %v110
    %146 = vmatprep.subr.mxu0 0.0
    %147 = vmatpush1.msra.mxu0 %v109
    %148 = vmatprep.subr.mxu0 0.0
    %149 = vmatpush2.msra.mxu0 0.0
    %150 = vmatprep.subr.mxu0 0.0
    %151 = vmatpush2.msra.mxu0 0.0
    %152 = vmatprep.subr.mxu0 0.0
    %153 = vmatpush2.msra.mxu0 0.0
    %154 = vmatprep.subr.mxu0 0.0
    %155 = vmatpush2.msra.mxu0 0.0
    %156 = vmatprep.subr.mxu0 0.0
    %157 = vmatpush2.msra.mxu0 0.0
    %158 = vmatprep.subr.mxu0 0.0
    %159 = vmatpush2.msra.mxu0 0.0
    %160 = vmatprep.subr.mxu0 0.0
    %161 = vmatpush2.msra.mxu0 0.0
    %162 = vmatprep.subr.mxu0 0.0
    %163 = vmatpush2.msra.mxu0 0.0
    %164 = vmatprep.subr.mxu0 0.0
    %165 = vmatpush2.msra.mxu0 0.0
    %166 = vmatprep.subr.mxu0 0.0
    %167 = vmatpush2.msra.mxu0 0.0
    %168 = vmatprep.subr.mxu0 0.0
    %169 = vmatpush2.msra.mxu0 0.0
    %170 = vmatprep.subr.mxu0 0.0
    %171 = vmatpush2.msra.mxu0 0.0
    %172 = vmatprep.subr.mxu0 0.0
    %173 = vmatpush2.msra.mxu0 0.0
    %174 = vmatprep.subr.mxu0 0.0
    %175 = vmatpush2.msra.mxu0 0.0
    %176 = vmatprep.subr.mxu0 0.0
    %177 = vmatpush2.msra.mxu0 0.0
    %178 = vmatprep.subr.mxu0 0.0
    %179 = vmatpush2.msra.mxu0 0.0
    %180 = vmatprep.mubr.f32.mxu0 0.0
    %181 = vmatmul.mubr.f32.gmra.mxu0 %v114
    %v182 = vpop.f32.mrf.mxu0
    %v183 = vadd.f32 0.0, %v182
    %v184 = vpop.f32.mrf.mxu0
    %185 = vdwg.mxu0
    %v186 = vmul.f32 %v183, 5.656854
    %188 = vrot.lane.b32.xlu0 %v186, 16
    %v189 = vpop.permute.xlu0 %188
    %vm191 = vcmask 261248
    %192 = vst.msk [vmem:[#allocation2] sm:$0xff] %vm191, %v189
    %v193 = vld [vmem:[%s0] sm:$0xff]
    %194 = vset.pattern.permute.xlu0 2
    %195 = vperm.xlu0 %194, %v193
    %v196 = vpop.permute.xlu0 %195
    %vm197 = vcmp.eq.s32.totalorder %v196, %v14
    %v198 = vsel %vm197, 1, 0
    %v199 = vcvt.s32.f32 %v198
    %v200 = vld [vmem:[%s1] sm:$0xff]
    %v201 = vld [vmem:[%s1 + $0x8] sm:$0xff]
    %v202 = vld [vmem:[%s1 + $0x10] sm:$0xff]
    %v203 = vld [vmem:[%s1 + $0x18] sm:$0xff]
    %v205 = vsel %vm25, %v199, 0
    %207 = vmatprep.subr.mxu0 0.0
    %208 = vmatpush1.msra.mxu0 0.0
    %209 = vmatprep.subr.mxu0 0.0
    %210 = vmatpush1.msra.mxu0 0.0
    %211 = vmatprep.subr.mxu0 0.0
    %212 = vmatpush1.msra.mxu0 0.0
    %213 = vmatprep.subr.mxu0 0.0
    %214 = vmatpush1.msra.mxu0 0.0
    %215 = vmatprep.subr.mxu0 0.0
    %216 = vmatpush1.msra.mxu0 0.0
    %217 = vmatprep.subr.mxu0 0.0
    %218 = vmatpush1.msra.mxu0 0.0
    %219 = vmatprep.subr.mxu0 0.0
    %220 = vmatpush1.msra.mxu0 0.0
    %221 = vmatprep.subr.mxu0 0.0
    %222 = vmatpush1.msra.mxu0 0.0
    %223 = vmatprep.subr.mxu0 0.0
    %224 = vmatpush1.msra.mxu0 0.0
    %225 = vmatprep.subr.mxu0 0.0
    %226 = vmatpush1.msra.mxu0 0.0
    %227 = vmatprep.subr.mxu0 0.0
    %228 = vmatpush1.msra.mxu0 0.0
    %229 = vmatprep.subr.mxu0 0.0
    %230 = vmatpush1.msra.mxu0 0.0
    %231 = vmatprep.subr.mxu0 0.0
    %232 = vmatpush1.msra.mxu0 %v203
    %233 = vmatprep.subr.mxu0 0.0
    %234 = vmatpush1.msra.mxu0 %v202
    %235 = vmatprep.subr.mxu0 0.0
    %236 = vmatpush1.msra.mxu0 %v201
    %237 = vmatprep.subr.mxu0 0.0
    %238 = vmatpush1.msra.mxu0 %v200
    %239 = vmatprep.subr.mxu0 0.0
    %240 = vmatpush2.msra.mxu0 0.0
    %241 = vmatprep.subr.mxu0 0.0
    %242 = vmatpush2.msra.mxu0 0.0
    %243 = vmatprep.subr.mxu0 0.0
    %244 = vmatpush2.msra.mxu0 0.0
    %245 = vmatprep.subr.mxu0 0.0
    %246 = vmatpush2.msra.mxu0 0.0
    %247 = vmatprep.subr.mxu0 0.0
    %248 = vmatpush2.msra.mxu0 0.0
    %249 = vmatprep.subr.mxu0 0.0
    %250 = vmatpush2.msra.mxu0 0.0
    %251 = vmatprep.subr.mxu0 0.0
    %252 = vmatpush2.msra.mxu0 0.0
    %253 = vmatprep.subr.mxu0 0.0
    %254 = vmatpush2.msra.mxu0 0.0
    %255 = vmatprep.subr.mxu0 0.0
    %256 = vmatpush2.msra.mxu0 0.0
    %257 = vmatprep.subr.mxu0 0.0
    %258 = vmatpush2.msra.mxu0 0.0
    %259 = vmatprep.subr.mxu0 0.0
    %260 = vmatpush2.msra.mxu0 0.0
    %261 = vmatprep.subr.mxu0 0.0
    %262 = vmatpush2.msra.mxu0 0.0
    %263 = vmatprep.subr.mxu0 0.0
    %264 = vmatpush2.msra.mxu0 0.0
    %265 = vmatprep.subr.mxu0 0.0
    %266 = vmatpush2.msra.mxu0 0.0
    %267 = vmatprep.subr.mxu0 0.0
    %268 = vmatpush2.msra.mxu0 0.0
    %269 = vmatprep.subr.mxu0 0.0
    %270 = vmatpush2.msra.mxu0 0.0
    %271 = vmatprep.mubr.f32.mxu0 0.0
    %272 = vmatmul.mubr.f32.gmra.mxu0 %v205
    %v273 = vpop.f32.mrf.mxu0
    %v274 = vadd.f32 0.0, %v273
    %v275 = vpop.f32.mrf.mxu0
    %276 = vdwg.mxu0
    %v277 = vmul.f32 %v274, 5.656854
    %279 = vrot.lane.b32.xlu0 %v277, 32
    %v280 = vpop.permute.xlu0 %279
    %vm282 = vcmask 392448
    %283 = vst.msk [vmem:[#allocation2] sm:$0xff] %vm282, %v280
    %v284 = vld [vmem:[%s0] sm:$0xff]
    %285 = vset.pattern.permute.xlu0 3
    %286 = vperm.xlu0 %285, %v284
    %v287 = vpop.permute.xlu0 %286
    %vm288 = vcmp.eq.s32.totalorder %v287, %v14
    %v289 = vsel %vm288, 1, 0
    %v290 = vcvt.s32.f32 %v289
    %v291 = vld [vmem:[%s1] sm:$0xff]
    %v292 = vld [vmem:[%s1 + $0x8] sm:$0xff]
    %v293 = vld [vmem:[%s1 + $0x10] sm:$0xff]
    %v294 = vld [vmem:[%s1 + $0x18] sm:$0xff]
    %v296 = vsel %vm25, %v290, 0
    %298 = vmatprep.subr.mxu0 0.0
    %299 = vmatpush1.msra.mxu0 0.0
    %300 = vmatprep.subr.mxu0 0.0
    %301 = vmatpush1.msra.mxu0 0.0
    %302 = vmatprep.subr.mxu0 0.0
    %303 = vmatpush1.msra.mxu0 0.0
    %304 = vmatprep.subr.mxu0 0.0
    %305 = vmatpush1.msra.mxu0 0.0
    %306 = vmatprep.subr.mxu0 0.0
    %307 = vmatpush1.msra.mxu0 0.0
    %308 = vmatprep.subr.mxu0 0.0
    %309 = vmatpush1.msra.mxu0 0.0
    %310 = vmatprep.subr.mxu0 0.0
    %311 = vmatpush1.msra.mxu0 0.0
    %312 = vmatprep.subr.mxu0 0.0
    %313 = vmatpush1.msra.mxu0 0.0
    %314 = vmatprep.subr.mxu0 0.0
    %315 = vmatpush1.msra.mxu0 0.0
    %316 = vmatprep.subr.mxu0 0.0
    %317 = vmatpush1.msra.mxu0 0.0
    %318 = vmatprep.subr.mxu0 0.0
    %319 = vmatpush1.msra.mxu0 0.0
    %320 = vmatprep.subr.mxu0 0.0
    %321 = vmatpush1.msra.mxu0 0.0
    %322 = vmatprep.subr.mxu0 0.0
    %323 = vmatpush1.msra.mxu0 %v294
    %324 = vmatprep.subr.mxu0 0.0
    %325 = vmatpush1.msra.mxu0 %v293
    %326 = vmatprep.subr.mxu0 0.0
    %327 = vmatpush1.msra.mxu0 %v292
    %328 = vmatprep.subr.mxu0 0.0
    %329 = vmatpush1.msra.mxu0 %v291
    %330 = vmatprep.subr.mxu0 0.0
    %331 = vmatpush2.msra.mxu0 0.0
    %332 = vmatprep.subr.mxu0 0.0
    %333 = vmatpush2.msra.mxu0 0.0
    %334 = vmatprep.subr.mxu0 0.0
    %335 = vmatpush2.msra.mxu0 0.0
    %336 = vmatprep.subr.mxu0 0.0
    %337 = vmatpush2.msra.mxu0 0.0
    %338 = vmatprep.subr.mxu0 0.0
    %339 = vmatpush2.msra.mxu0 0.0
    %340 = vmatprep.subr.mxu0 0.0
    %341 = vmatpush2.msra.mxu0 0.0
    %342 = vmatprep.subr.mxu0 0.0
    %343 = vmatpush2.msra.mxu0 0.0
    %344 = vmatprep.subr.mxu0 0.0
    %345 = vmatpush2.msra.mxu0 0.0
    %346 = vmatprep.subr.mxu0 0.0
    %347 = vmatpush2.msra.mxu0 0.0
    %348 = vmatprep.subr.mxu0 0.0
    %349 = vmatpush2.msra.mxu0 0.0
    %350 = vmatprep.subr.mxu0 0.0
    %351 = vmatpush2.msra.mxu0 0.0
    %352 = vmatprep.subr.mxu0 0.0
    %353 = vmatpush2.msra.mxu0 0.0
    %354 = vmatprep.subr.mxu0 0.0
    %355 = vmatpush2.msra.mxu0 0.0
    %356 = vmatprep.subr.mxu0 0.0
    %357 = vmatpush2.msra.mxu0 0.0
    %358 = vmatprep.subr.mxu0 0.0
    %359 = vmatpush2.msra.mxu0 0.0
    %360 = vmatprep.subr.mxu0 0.0
    %361 = vmatpush2.msra.mxu0 0.0
    %362 = vmatprep.mubr.f32.mxu0 0.0
    %363 = vmatmul.mubr.f32.gmra.mxu0 %v296
    %v364 = vpop.f32.mrf.mxu0
    %v365 = vadd.f32 0.0, %v364
    %v366 = vpop.f32.mrf.mxu0
    %367 = vdwg.mxu0
    %v368 = vmul.f32 %v365, 5.656854
    %370 = vrot.lane.b32.xlu0 %v368, 48
    %v371 = vpop.permute.xlu0 %370
    %vm373 = vcmask 523648
    %374 = vst.msk [vmem:[#allocation2] sm:$0xff] %vm373, %v371
    %v375 = vld [vmem:[%s0] sm:$0xff]
    %376 = vset.pattern.permute.xlu0 4
    %377 = vperm.xlu0 %376, %v375
    %v378 = vpop.permute.xlu0 %377
    %vm379 = vcmp.eq.s32.totalorder %v378, %v14
    %v380 = vsel %vm379, 1, 0
    %v381 = vcvt.s32.f32 %v380
    %v382 = vld [vmem:[%s1] sm:$0xff]
    %v383 = vld [vmem:[%s1 + $0x8] sm:$0xff]
    %v384 = vld [vmem:[%s1 + $0x10] sm:$0xff]
    %v385 = vld [vmem:[%s1 + $0x18] sm:$0xff]
    %v387 = vsel %vm25, %v381, 0
    %389 = vmatprep.subr.mxu0 0.0
    %390 = vmatpush1.msra.mxu0 0.0
    %391 = vmatprep.subr.mxu0 0.0
    %392 = vmatpush1.msra.mxu0 0.0
    %393 = vmatprep.subr.mxu0 0.0
    %394 = vmatpush1.msra.mxu0 0.0
    %395 = vmatprep.subr.mxu0 0.0
    %396 = vmatpush1.msra.mxu0 0.0
    %397 = vmatprep.subr.mxu0 0.0
    %398 = vmatpush1.msra.mxu0 0.0
    %399 = vmatprep.subr.mxu0 0.0
    %400 = vmatpush1.msra.mxu0 0.0
    %401 = vmatprep.subr.mxu0 0.0
    %402 = vmatpush1.msra.mxu0 0.0
    %403 = vmatprep.subr.mxu0 0.0
    %404 = vmatpush1.msra.mxu0 0.0
    %405 = vmatprep.subr.mxu0 0.0
    %406 = vmatpush1.msra.mxu0 0.0
    %407 = vmatprep.subr.mxu0 0.0
    %408 = vmatpush1.msra.mxu0 0.0
    %409 = vmatprep.subr.mxu0 0.0
    %410 = vmatpush1.msra.mxu0 0.0
    %411 = vmatprep.subr.mxu0 0.0
    %412 = vmatpush1.msra.mxu0 0.0
    %413 = vmatprep.subr.mxu0 0.0
    %414 = vmatpush1.msra.mxu0 %v385
    %415 = vmatprep.subr.mxu0 0.0
    %416 = vmatpush1.msra.mxu0 %v384
    %417 = vmatprep.subr.mxu0 0.0
    %418 = vmatpush1.msra.mxu0 %v383
    %419 = vmatprep.subr.mxu0 0.0
    %420 = vmatpush1.msra.mxu0 %v382
    %421 = vmatprep.subr.mxu0 0.0
    %422 = vmatpush2.msra.mxu0 0.0
    %423 = vmatprep.subr.mxu0 0.0
    %424 = vmatpush2.msra.mxu0 0.0
    %425 = vmatprep.subr.mxu0 0.0
    %426 = vmatpush2.msra.mxu0 0.0
    %427 = vmatprep.subr.mxu0 0.0
    %428 = vmatpush2.msra.mxu0 0.0
    %429 = vmatprep.subr.mxu0 0.0
    %430 = vmatpush2.msra.mxu0 0.0
    %431 = vmatprep.subr.mxu0 0.0
    %432 = vmatpush2.msra.mxu0 0.0
    %433 = vmatprep.subr.mxu0 0.0
    %434 = vmatpush2.msra.mxu0 0.0
    %435 = vmatprep.subr.mxu0 0.0
    %436 = vmatpush2.msra.mxu0 0.0
    %437 = vmatprep.subr.mxu0 0.0
    %438 = vmatpush2.msra.mxu0 0.0
    %439 = vmatprep.subr.mxu0 0.0
    %440 = vmatpush2.msra.mxu0 0.0
    %441 = vmatprep.subr.mxu0 0.0
    %442 = vmatpush2.msra.mxu0 0.0
    %443 = vmatprep.subr.mxu0 0.0
    %444 = vmatpush2.msra.mxu0 0.0
    %445 = vmatprep.subr.mxu0 0.0
    %446 = vmatpush2.msra.mxu0 0.0
    %447 = vmatprep.subr.mxu0 0.0
    %448 = vmatpush2.msra.mxu0 0.0
    %449 = vmatprep.subr.mxu0 0.0
    %450 = vmatpush2.msra.mxu0 0.0
    %451 = vmatprep.subr.mxu0 0.0
    %452 = vmatpush2.msra.mxu0 0.0
    %453 = vmatprep.mubr.f32.mxu0 0.0
    %454 = vmatmul.mubr.f32.gmra.mxu0 %v387
    %v455 = vpop.f32.mrf.mxu0
    %v456 = vadd.f32 0.0, %v455
    %v457 = vpop.f32.mrf.mxu0
    %458 = vdwg.mxu0
    %v459 = vmul.f32 %v456, 5.656854
    %461 = vrot.lane.b32.xlu0 %v459, 64
    %v462 = vpop.permute.xlu0 %461
    %vm464 = vcmask 654848
    %465 = vst.msk [vmem:[#allocation2] sm:$0xff] %vm464, %v462
    %v466 = vld [vmem:[%s0] sm:$0xff]
    %467 = vset.pattern.permute.xlu0 5
    %468 = vperm.xlu0 %467, %v466
    %v469 = vpop.permute.xlu0 %468
    %vm470 = vcmp.eq.s32.totalorder %v469, %v14
    %v471 = vsel %vm470, 1, 0
    %v472 = vcvt.s32.f32 %v471
    %v473 = vld [vmem:[%s1] sm:$0xff]
    %v474 = vld [vmem:[%s1 + $0x8] sm:$0xff]
    %v475 = vld [vmem:[%s1 + $0x10] sm:$0xff]
    %v476 = vld [vmem:[%s1 + $0x18] sm:$0xff]
    %v478 = vsel %vm25, %v472, 0
    %480 = vmatprep.subr.mxu0 0.0
    %481 = vmatpush1.msra.mxu0 0.0
    %482 = vmatprep.subr.mxu0 0.0
    %483 = vmatpush1.msra.mxu0 0.0
    %484 = vmatprep.subr.mxu0 0.0
    %485 = vmatpush1.msra.mxu0 0.0
    %486 = vmatprep.subr.mxu0 0.0
    %487 = vmatpush1.msra.mxu0 0.0
    %488 = vmatprep.subr.mxu0 0.0
    %489 = vmatpush1.msra.mxu0 0.0
    %490 = vmatprep.subr.mxu0 0.0
    %491 = vmatpush1.msra.mxu0 0.0
    %492 = vmatprep.subr.mxu0 0.0
    %493 = vmatpush1.msra.mxu0 0.0
    %494 = vmatprep.subr.mxu0 0.0
    %495 = vmatpush1.msra.mxu0 0.0
    %496 = vmatprep.subr.mxu0 0.0
    %497 = vmatpush1.msra.mxu0 0.0
    %498 = vmatprep.subr.mxu0 0.0
    %499 = vmatpush1.msra.mxu0 0.0
    %500 = vmatprep.subr.mxu0 0.0
    %501 = vmatpush1.msra.mxu0 0.0
    %502 = vmatprep.subr.mxu0 0.0
    %503 = vmatpush1.msra.mxu0 0.0
    %504 = vmatprep.subr.mxu0 0.0
    %505 = vmatpush1.msra.mxu0 %v476
    %506 = vmatprep.subr.mxu0 0.0
    %507 = vmatpush1.msra.mxu0 %v475
    %508 = vmatprep.subr.mxu0 0.0
    %509 = vmatpush1.msra.mxu0 %v474
    %510 = vmatprep.subr.mxu0 0.0
    %511 = vmatpush1.msra.mxu0 %v473
    %512 = vmatprep.subr.mxu0 0.0
    %513 = vmatpush2.msra.mxu0 0.0
    %514 = vmatprep.subr.mxu0 0.0
    %515 = vmatpush2.msra.mxu0 0.0
    %516 = vmatprep.subr.mxu0 0.0
    %517 = vmatpush2.msra.mxu0 0.0
    %518 = vmatprep.subr.mxu0 0.0
    %519 = vmatpush2.msra.mxu0 0.0
    %520 = vmatprep.subr.mxu0 0.0
    %521 = vmatpush2.msra.mxu0 0.0
    %522 = vmatprep.subr.mxu0 0.0
    %523 = vmatpush2.msra.mxu0 0.0
    %524 = vmatprep.subr.mxu0 0.0
    %525 = vmatpush2.msra.mxu0 0.0
    %526 = vmatprep.subr.mxu0 0.0
    %527 = vmatpush2.msra.mxu0 0.0
    %528 = vmatprep.subr.mxu0 0.0
    %529 = vmatpush2.msra.mxu0 0.0
    %530 = vmatprep.subr.mxu0 0.0
    %531 = vmatpush2.msra.mxu0 0.0
    %532 = vmatprep.subr.mxu0 0.0
    %533 = vmatpush2.msra.mxu0 0.0
    %534 = vmatprep.subr.mxu0 0.0
    %535 = vmatpush2.msra.mxu0 0.0
    %536 = vmatprep.subr.mxu0 0.0
    %537 = vmatpush2.msra.mxu0 0.0
    %538 = vmatprep.subr.mxu0 0.0
    %539 = vmatpush2.msra.mxu0 0.0
    %540 = vmatprep.subr.mxu0 0.0
    %541 = vmatpush2.msra.mxu0 0.0
    %542 = vmatprep.subr.mxu0 0.0
    %543 = vmatpush2.msra.mxu0 0.0
    %544 = vmatprep.mubr.f32.mxu0 0.0
    %545 = vmatmul.mubr.f32.gmra.mxu0 %v478
    %v546 = vpop.f32.mrf.mxu0
    %v547 = vadd.f32 0.0, %v546
    %v548 = vpop.f32.mrf.mxu0
    %549 = vdwg.mxu0
    %v550 = vmul.f32 %v547, 5.656854
    %552 = vrot.lane.b32.xlu0 %v550, 80
    %v553 = vpop.permute.xlu0 %552
    %vm555 = vcmask 786048
    %556 = vst.msk [vmem:[#allocation2] sm:$0xff] %vm555, %v553
    %v557 = vld [vmem:[%s0] sm:$0xff]
    %558 = vset.pattern.permute.xlu0 6
    %559 = vperm.xlu0 %558, %v557
    %v560 = vpop.permute.xlu0 %559
    %vm561 = vcmp.eq.s32.totalorder %v560, %v14
    %v562 = vsel %vm561, 1, 0
    %v563 = vcvt.s32.f32 %v562
    %v564 = vld [vmem:[%s1] sm:$0xff]
    %v565 = vld [vmem:[%s1 + $0x8] sm:$0xff]
    %v566 = vld [vmem:[%s1 + $0x10] sm:$0xff]
    %v567 = vld [vmem:[%s1 + $0x18] sm:$0xff]
    %v569 = vsel %vm25, %v563, 0
    %571 = vmatprep.subr.mxu0 0.0
    %572 = vmatpush1.msra.mxu0 0.0
    %573 = vmatprep.subr.mxu0 0.0
    %574 = vmatpush1.msra.mxu0 0.0
    %575 = vmatprep.subr.mxu0 0.0
    %576 = vmatpush1.msra.mxu0 0.0
    %577 = vmatprep.subr.mxu0 0.0
    %578 = vmatpush1.msra.mxu0 0.0
    %579 = vmatprep.subr.mxu0 0.0
    %580 = vmatpush1.msra.mxu0 0.0
    %581 = vmatprep.subr.mxu0 0.0
    %582 = vmatpush1.msra.mxu0 0.0
    %583 = vmatprep.subr.mxu0 0.0
    %584 = vmatpush1.msra.mxu0 0.0
    %585 = vmatprep.subr.mxu0 0.0
    %586 = vmatpush1.msra.mxu0 0.0
    %587 = vmatprep.subr.mxu0 0.0
    %588 = vmatpush1.msra.mxu0 0.0
    %589 = vmatprep.subr.mxu0 0.0
    %590 = vmatpush1.msra.mxu0 0.0
    %591 = vmatprep.subr.mxu0 0.0
    %592 = vmatpush1.msra.mxu0 0.0
    %593 = vmatprep.subr.mxu0 0.0
    %594 = vmatpush1.msra.mxu0 0.0
    %595 = vmatprep.subr.mxu0 0.0
    %596 = vmatpush1.msra.mxu0 %v567
    %597 = vmatprep.subr.mxu0 0.0
    %598 = vmatpush1.msra.mxu0 %v566
    %599 = vmatprep.subr.mxu0 0.0
    %600 = vmatpush1.msra.mxu0 %v565
    %601 = vmatprep.subr.mxu0 0.0
    %602 = vmatpush1.msra.mxu0 %v564
    %603 = vmatprep.subr.mxu0 0.0
    %604 = vmatpush2.msra.mxu0 0.0
    %605 = vmatprep.subr.mxu0 0.0
    %606 = vmatpush2.msra.mxu0 0.0
    %607 = vmatprep.subr.mxu0 0.0
    %608 = vmatpush2.msra.mxu0 0.0
    %609 = vmatprep.subr.mxu0 0.0
    %610 = vmatpush2.msra.mxu0 0.0
    %611 = vmatprep.subr.mxu0 0.0
    %612 = vmatpush2.msra.mxu0 0.0
    %613 = vmatprep.subr.mxu0 0.0
    %614 = vmatpush2.msra.mxu0 0.0
    %615 = vmatprep.subr.mxu0 0.0
    %616 = vmatpush2.msra.mxu0 0.0
    %617 = vmatprep.subr.mxu0 0.0
    %618 = vmatpush2.msra.mxu0 0.0
    %619 = vmatprep.subr.mxu0 0.0
    %620 = vmatpush2.msra.mxu0 0.0
    %621 = vmatprep.subr.mxu0 0.0
    %622 = vmatpush2.msra.mxu0 0.0
    %623 = vmatprep.subr.mxu0 0.0
    %624 = vmatpush2.msra.mxu0 0.0
    %625 = vmatprep.subr.mxu0 0.0
    %626 = vmatpush2.msra.mxu0 0.0
    %627 = vmatprep.subr.mxu0 0.0
    %628 = vmatpush2.msra.mxu0 0.0
    %629 = vmatprep.subr.mxu0 0.0
    %630 = vmatpush2.msra.mxu0 0.0
    %631 = vmatprep.subr.mxu0 0.0
    %632 = vmatpush2.msra.mxu0 0.0
    %633 = vmatprep.subr.mxu0 0.0
    %634 = vmatpush2.msra.mxu0 0.0
    %635 = vmatprep.mubr.f32.mxu0 0.0
    %636 = vmatmul.mubr.f32.gmra.mxu0 %v569
    %v637 = vpop.f32.mrf.mxu0
    %v638 = vadd.f32 0.0, %v637
    %v639 = vpop.f32.mrf.mxu0
    %640 = vdwg.mxu0
    %v641 = vmul.f32 %v638, 5.656854
    %643 = vrot.lane.b32.xlu0 %v641, 96
    %v644 = vpop.permute.xlu0 %643
    %vm646 = vcmask 917248
    %647 = vst.msk [vmem:[#allocation2] sm:$0xff] %vm646, %v644
    %v648 = vld [vmem:[%s0] sm:$0xff]
    %649 = vset.pattern.permute.xlu0 7
    %650 = vperm.xlu0 %649, %v648
    %v651 = vpop.permute.xlu0 %650
    %vm652 = vcmp.eq.s32.totalorder %v651, %v14
    %v653 = vsel %vm652, 1, 0
    %v654 = vcvt.s32.f32 %v653
    %v655 = vld [vmem:[%s1] sm:$0xff]
    %v656 = vld [vmem:[%s1 + $0x8] sm:$0xff]
    %v657 = vld [vmem:[%s1 + $0x10] sm:$0xff]
    %v658 = vld [vmem:[%s1 + $0x18] sm:$0xff]
    %v660 = vsel %vm25, %v654, 0
    %662 = vmatprep.subr.mxu0 0.0
    %663 = vmatpush1.msra.mxu0 0.0
    %664 = vmatprep.subr.mxu0 0.0
    %665 = vmatpush1.msra.mxu0 0.0
    %666 = vmatprep.subr.mxu0 0.0
    %667 = vmatpush1.msra.mxu0 0.0
    %668 = vmatprep.subr.mxu0 0.0
    %669 = vmatpush1.msra.mxu0 0.0
    %670 = vmatprep.subr.mxu0 0.0
    %671 = vmatpush1.msra.mxu0 0.0
    %672 = vmatprep.subr.mxu0 0.0
    %673 = vmatpush1.msra.mxu0 0.0
    %674 = vmatprep.subr.mxu0 0.0
    %675 = vmatpush1.msra.mxu0 0.0
    %676 = vmatprep.subr.mxu0 0.0
    %677 = vmatpush1.msra.mxu0 0.0
    %678 = vmatprep.subr.mxu0 0.0
    %679 = vmatpush1.msra.mxu0 0.0
    %680 = vmatprep.subr.mxu0 0.0
    %681 = vmatpush1.msra.mxu0 0.0
    %682 = vmatprep.subr.mxu0 0.0
    %683 = vmatpush1.msra.mxu0 0.0
    %684 = vmatprep.subr.mxu0 0.0
    %685 = vmatpush1.msra.mxu0 0.0
    %686 = vmatprep.subr.mxu0 0.0
    %687 = vmatpush1.msra.mxu0 %v658
    %688 = vmatprep.subr.mxu0 0.0
    %689 = vmatpush1.msra.mxu0 %v657
    %690 = vmatprep.subr.mxu0 0.0
    %691 = vmatpush1.msra.mxu0 %v656
    %692 = vmatprep.subr.mxu0 0.0
    %693 = vmatpush1.msra.mxu0 %v655
    %694 = vmatprep.subr.mxu0 0.0
    %695 = vmatpush2.msra.mxu0 0.0
    %696 = vmatprep.subr.mxu0 0.0
    %697 = vmatpush2.msra.mxu0 0.0
    %698 = vmatprep.subr.mxu0 0.0
    %699 = vmatpush2.msra.mxu0 0.0
    %700 = vmatprep.subr.mxu0 0.0
    %701 = vmatpush2.msra.mxu0 0.0
    %702 = vmatprep.subr.mxu0 0.0
    %703 = vmatpush2.msra.mxu0 0.0
    %704 = vmatprep.subr.mxu0 0.0
    %705 = vmatpush2.msra.mxu0 0.0
    %706 = vmatprep.subr.mxu0 0.0
    %707 = vmatpush2.msra.mxu0 0.0
    %708 = vmatprep.subr.mxu0 0.0
    %709 = vmatpush2.msra.mxu0 0.0
    %710 = vmatprep.subr.mxu0 0.0
    %711 = vmatpush2.msra.mxu0 0.0
    %712 = vmatprep.subr.mxu0 0.0
    %713 = vmatpush2.msra.mxu0 0.0
    %714 = vmatprep.subr.mxu0 0.0
    %715 = vmatpush2.msra.mxu0 0.0
    %716 = vmatprep.subr.mxu0 0.0
    %717 = vmatpush2.msra.mxu0 0.0
    %718 = vmatprep.subr.mxu0 0.0
    %719 = vmatpush2.msra.mxu0 0.0
    %720 = vmatprep.subr.mxu0 0.0
    %721 = vmatpush2.msra.mxu0 0.0
    %722 = vmatprep.subr.mxu0 0.0
    %723 = vmatpush2.msra.mxu0 0.0
    %724 = vmatprep.subr.mxu0 0.0
    %725 = vmatpush2.msra.mxu0 0.0
    %726 = vmatprep.mubr.f32.mxu0 0.0
    %727 = vmatmul.mubr.f32.gmra.mxu0 %v660
    %v728 = vpop.f32.mrf.mxu0
    %v729 = vadd.f32 0.0, %v728
    %v730 = vpop.f32.mrf.mxu0
    %731 = vdwg.mxu0
    %v732 = vmul.f32 %v729, 5.656854
    %734 = vrot.lane.b32.xlu0 %v732, 112
    %v735 = vpop.permute.xlu0 %734
    %vm737 = vcmask 1048448
    %738 = vst.msk [vmem:[#allocation2] sm:$0xff] %vm737, %v735
    // Predicated region
    $region10: #{tpu_custom_call.1} parent=1 // pred_check
      _
    $region11: #{tpu_custom_call.1} parent=1 // pred_check_branch
      %740 = sbr.rel (0) target = $region13
    $region12: #{tpu_custom_call.1} parent=1 // pred_region
      %s742 = ssub.s32 128, 128
      %743 = vsyncadd [#allocation3], %s742
      %s745 = sshll.u32 [#allocation2], 4
      %s746 = int_to_ptr.vmem [resolvable:$true] %s745
      %748 = dma.vmem_to_hbm [thread:$0]  %s746, 128, %s2, [#allocation3]
    $region13: #{tpu_custom_call.1} parent=1 // pred_fallthru
      _
    // Predicated region
    $region14: #{tpu_custom_call.1} parent=1 // pred_check
      _
    $region15: #{tpu_custom_call.1} parent=1 // pred_check_branch
      %750 = sbr.rel (0) target = $region17
    $region16: #{tpu_custom_call.1} parent=1 // pred_region
      %751 = dma.done [#allocation3], 128
    $region17: #{tpu_custom_call.1} parent=1 // pred_fallthru
      _
    %752 = vsyncpa [#allocation3], 1

</llo_original>
